<compile_context>
chip_gen: v7x
topology: tpu7x:2x2x1
jax: 0.10.0
libtpu: 0.0.40
codegen_flags: <defaults>
</compile_context>

<pallas_src>
import functools

import jax
import jax.numpy as jnp
from jax import lax
from jax.experimental import pallas as pl
from jax.experimental.pallas import tpu as pltpu


# --------------------------------------------------------------------------------------
# One-time probe of pltpu.roll's rotation convention (guards against direction
# differences across Mosaic versions).  Result is cached; safe under jit via
# ensure_compile_time_eval.
# --------------------------------------------------------------------------------------
_ROLL_LIKE_NUMPY = None


def _roll_like_numpy() -> bool:
    global _ROLL_LIKE_NUMPY
    if _ROLL_LIKE_NUMPY is None:
        with jax.ensure_compile_time_eval():
            def probe(x_ref, o_ref):
                o_ref[...] = pltpu.roll(x_ref[...], 1, 1)

            xp = jnp.broadcast_to(jnp.arange(128, dtype=jnp.float32), (8, 128))
            out = pl.pallas_call(
                probe, out_shape=jax.ShapeDtypeStruct((8, 128), jnp.float32))(xp)
            # np.roll([0..127], 1)[0] == 127
            _ROLL_LIKE_NUMPY = bool(out[0, 0] == 127.0)
    return _ROLL_LIKE_NUMPY


# --------------------------------------------------------------------------------------
# Fused DownBlock kernel:
#   GroupNorm -> SiLU -> conv3x3 -> +temb -> GroupNorm -> SiLU -> conv3x3
#   -> + shortcut(conv3x3 or identity) -> [optional per-pixel head attention]
# One grid step = one image; channels on sublanes, HW pixels on lanes.
# --------------------------------------------------------------------------------------
def _make_down_block_kernel(H, W, n_heads, d_k, has_sc, has_attn, roll_like_numpy):
    HW = H * W
    HD = n_heads * d_k
    EPS = 1e-5
    bf16 = jnp.bfloat16

    def shift_for(off):
        # we need win[l] = src[l + off]; pltpu.roll follows jnp.roll semantics
        # (probed), i.e. roll(x, s)[l] = x[(l - s) % HW]  ->  s = -off.
        s = (-off) if roll_like_numpy else off
        return s % HW

    def silu(v):
        return v * (1.0 / (1.0 + jnp.exp(-v)))

    def kernel(x_ref, temb_ref, masks_ref,
               a1_ref, g1_ref, be1_ref, w1_ref, cb1_ref,
               a2_ref, g2_ref, be2_ref, w2_ref, cb2_ref,
               *rest):
        pos = 0
        if has_sc:
            wsc_ref, bsc_ref = rest[pos], rest[pos + 1]
            pos += 2
        if has_attn:
            (wq_ref, bq_ref, wk_ref, bk_ref, wv_ref, bv_ref,
             rsum_ref, wd_ref, bd_ref) = rest[pos:pos + 9]
            pos += 9
        o_ref = rest[pos]

        def group_norm(v, a_ref, g_ref, b_ref):
            # v: (C, HW) f32.  a_ref is the (C, C) block-diagonal group-averaging
            # matrix; statistics stay in f32 (single-pass var is fine in f32).
            gm = jnp.dot(a_ref[...], v, preferred_element_type=jnp.float32)
            gm2 = jnp.dot(a_ref[...], v * v, preferred_element_type=jnp.float32)
            mean = jnp.mean(gm, axis=1, keepdims=True)       # (C, 1) group mean
            mean_sq = jnp.mean(gm2, axis=1, keepdims=True)   # (C, 1) group E[x^2]
            var = mean_sq - mean * mean
            vn = (v - mean) * lax.rsqrt(var + EPS)
            return vn * g_ref[...] + b_ref[...]

        def conv3x3(src, w_ref, b_ref):
            # src: (Ci, HW) f32.  "Same" 3x3 conv as im2col + ONE bf16 MXU matmul.
            # Shifted taps via pltpu.roll (XLU) + precomputed validity masks:
            # no halo scratch buffer, no unaligned lane loads/stores.
            parts = []
            m = 0
            for dy in (-1, 0, 1):
                for dx in (-1, 0, 1):
                    if dy == 0 and dx == 0:
                        parts.append(src.astype(bf16))
                    else:
                        off = dy * W + dx
                        win = pltpu.roll(src, shift_for(off), 1)
                        win = win * masks_ref[m:m + 1, :]
                        parts.append(win.astype(bf16))
                        m += 1
            patches = jnp.concatenate(parts, axis=0)         # (9*Ci, HW) bf16
            out = jnp.dot(w_ref[...], patches,
                          preferred_element_type=jnp.float32)  # (Co, HW) on the MXU
            return out + b_ref[...]

        x = x_ref[0]                                          # (Cin, HW) f32

        h = silu(group_norm(x, a1_ref, g1_ref, be1_ref))
        h = conv3x3(h, w1_ref, cb1_ref)                       # (Cout, HW)
        h = h + temb_ref[0]                                   # (Cout, 1) broadcast
        h = silu(group_norm(h, a2_ref, g2_ref, be2_ref))
        h = conv3x3(h, w2_ref, cb2_ref)
        if has_sc:
            h = h + conv3x3(x, wsc_ref, bsc_ref)              # shortcut conv
        else:
            h = h + x                                         # identity shortcut

        if not has_attn:
            o_ref[0] = h.astype(o_ref.dtype)
            return

        # ---- AttentionBlock (per-pixel head-vs-head attention) ----
        xa = h                                                # (Cout, HW) f32
        xab = xa.astype(bf16)
        # wq/bq are pre-scaled by sqrt(d_k) in the wrapper (module divides by d_k**-0.5)
        qt = jnp.dot(wq_ref[...], xab, preferred_element_type=jnp.float32) + bq_ref[...]
        kt = jnp.dot(wk_ref[...], xab, preferred_element_type=jnp.float32) + bk_ref[...]
        vt = jnp.dot(wv_ref[...], xab, preferred_element_type=jnp.float32) + bv_ref[...]

        res = None
        for j in range(n_heads):
            k_j = kt[j * d_k:(j + 1) * d_k, :]                # (d_k, HW)
            v_j = vt[j * d_k:(j + 1) * d_k, :]                # (d_k, HW)
            k_tiled = jnp.concatenate([k_j] * n_heads, axis=0)    # (HD, HW)
            # dense scores: s_j[i, l] = <q_i(l), k_j(l)> * sqrt(d_k)
            s_j = jnp.dot(rsum_ref[...], qt * k_tiled,
                          preferred_element_type=jnp.float32)     # (n_heads, HW)
            # softmax over the query-head axis i (torch softmax(dim=2))
            m_j = jnp.max(s_j, axis=0, keepdims=True)
            p_j = jnp.exp(s_j - m_j)
            den = jnp.sum(p_j, axis=0, keepdims=True)
            attn_j = p_j * pl.reciprocal(den, approx=True)        # (n_heads, HW)
            # res[i*d_k + d, l] += attn_j[i, l] * v_j[d, l]
            attn_exp = jnp.concatenate(
                [jnp.broadcast_to(attn_j[i:i + 1, :], (d_k, HW))
                 for i in range(n_heads)], axis=0)                # (HD, HW)
            v_tiled = jnp.concatenate([v_j] * n_heads, axis=0)    # (HD, HW)
            contrib = attn_exp * v_tiled
            res = contrib if res is None else res + contrib

        out = (jnp.dot(wd_ref[...], res.astype(bf16),
                       preferred_element_type=jnp.float32)
               + bd_ref[...] + xa)
        o_ref[0] = out.astype(o_ref.dtype)

    return kernel


# --------------------------------------------------------------------------------------
# Wrapper
# --------------------------------------------------------------------------------------
def down_block_forward(x, t, params, *, n_groups=16, n_heads=8, d_k=None, has_attn=True):
    f32 = jnp.float32
    bf16 = jnp.bfloat16
    N, Cin, H, W = x.shape
    Cout = params["conv1_w"].shape[0]
    HW = H * W
    if d_k is None:
        d_k = Cout
    HD = n_heads * d_k
    has_sc = (Cin != Cout)
    roll_np = _roll_like_numpy()

    def silu(v):
        return v * (1.0 / (1.0 + jnp.exp(-v)))

    x_flat = x.reshape(N, Cin, HW).astype(f32)

    # tiny (N, time_ch) -> (N, Cout) time-embedding linear, done in XLA
    temb = silu(t.astype(f32)) @ params["time_w"].T.astype(f32) + params["time_b"].astype(f32)
    temb = temb.reshape(N, Cout, 1)

    # block-diagonal group-averaging matrices for in-kernel GroupNorm statistics
    def group_avg_matrix(c):
        gs = c // n_groups
        return jnp.kron(jnp.eye(n_groups, dtype=f32), jnp.full((gs, gs), 1.0 / gs, f32))

    a1 = group_avg_matrix(Cin)
    a2 = group_avg_matrix(Cout)

    # validity masks for the 8 shifted conv taps (dy, dx) != (0, 0)
    ys = jnp.arange(HW, dtype=jnp.int32) // W
    xs = jnp.arange(HW, dtype=jnp.int32) % W
    mask_rows = []
    for dy in (-1, 0, 1):
        for dx in (-1, 0, 1):
            if dy == 0 and dx == 0:
                continue
            ok = (ys + dy >= 0) & (ys + dy < H) & (xs + dx >= 0) & (xs + dx < W)
            mask_rows.append(ok.astype(f32))
    masks = jnp.stack(mask_rows, axis=0)                          # (8, HW)

    def conv_w_mat(w):  # OIHW -> (O, 9*I) bf16, column index = (ky*3 + kx)*I + i
        o, i = w.shape[0], w.shape[1]
        return w.transpose(0, 2, 3, 1).reshape(o, 9 * i).astype(bf16)

    def col(v):
        return v.reshape(-1, 1).astype(f32)

    def const2(shape):
        return pl.BlockSpec(shape, lambda n: (0, 0))

    inputs = [
        x_flat, temb, masks,
        a1, col(params["norm1_g"]), col(params["norm1_b"]),
        conv_w_mat(params["conv1_w"]), col(params["conv1_b"]),
        a2, col(params["norm2_g"]), col(params["norm2_b"]),
        conv_w_mat(params["conv2_w"]), col(params["conv2_b"]),
    ]
    in_specs = [
        pl.BlockSpec((1, Cin, HW), lambda n: (n, 0, 0)),
        pl.BlockSpec((1, Cout, 1), lambda n: (n, 0, 0)),
        const2((8, HW)),
        const2((Cin, Cin)), const2((Cin, 1)), const2((Cin, 1)),
        const2((Cout, 9 * Cin)), const2((Cout, 1)),
        const2((Cout, Cout)), const2((Cout, 1)), const2((Cout, 1)),
        const2((Cout, 9 * Cout)), const2((Cout, 1)),
    ]
    if has_sc:
        inputs += [conv_w_mat(params["sc_w"]), col(params["sc_b"])]
        in_specs += [const2((Cout, 9 * Cin)), const2((Cout, 1))]
    if has_attn:
        qkv_w = params["qkv_w"].astype(f32).reshape(n_heads, 3 * d_k, Cout)
        qkv_b = params["qkv_b"].astype(f32).reshape(n_heads, 3 * d_k)
        scale = float(d_k) ** 0.5      # module divides scores by d_k**-0.5
        wq = (qkv_w[:, :d_k, :].reshape(HD, Cout) * scale).astype(bf16)
        bq = (qkv_b[:, :d_k].reshape(HD, 1) * scale).astype(f32)
        wk = qkv_w[:, d_k:2 * d_k, :].reshape(HD, Cout).astype(bf16)
        bk = qkv_b[:, d_k:2 * d_k].reshape(HD, 1).astype(f32)
        wv = qkv_w[:, 2 * d_k:, :].reshape(HD, Cout).astype(bf16)
        bv = qkv_b[:, 2 * d_k:].reshape(HD, 1).astype(f32)
        # group-sum matrix: rsum[i, i*d_k + d] = 1  (collapses d_k rows per head)
        rsum = jnp.kron(jnp.eye(n_heads, dtype=f32), jnp.ones((1, d_k), f32))
        wd = params["dense_w"].astype(bf16)                      # (Cout, HD)
        bd = col(params["dense_b"])
        inputs += [wq, bq, wk, bk, wv, bv, rsum, wd, bd]
        in_specs += [const2((HD, Cout)), const2((HD, 1)),
                     const2((HD, Cout)), const2((HD, 1)),
                     const2((HD, Cout)), const2((HD, 1)),
                     const2((n_heads, HD)),
                     const2((Cout, HD)), const2((Cout, 1))]

    kernel = _make_down_block_kernel(H, W, n_heads, d_k, has_sc, has_attn, roll_np)

    out = pl.pallas_call(
        kernel,
        out_shape=jax.ShapeDtypeStruct((N, Cout, HW), f32),
        grid_spec=pltpu.PrefetchScalarGridSpec(
            num_scalar_prefetch=0,
            grid=(N,),
            in_specs=in_specs,
            out_specs=pl.BlockSpec((1, Cout, HW), lambda n: (n, 0, 0)),
        ),
        compiler_params=pltpu.CompilerParams(dimension_semantics=("parallel",)),
    )(*inputs)

    return out.reshape(N, Cout, H, W)


# --------------------------------------------------------------------------------------
# Pure-JAX reference (mirrors the PyTorch module exactly)
# --------------------------------------------------------------------------------------
def reference_down_block(x, t, params, *, n_groups=16, n_heads=8, d_k=None, has_attn=True):
    prec = lax.Precision.HIGHEST
    f32 = jnp.float32
    N, Cin, H, W = x.shape
    Cout = params["conv1_w"].shape[0]
    if d_k is None:
        d_k = Cout

    def silu(v):
        return v * (1.0 / (1.0 + jnp.exp(-v)))

    def group_norm(v, g, b):
        vg = v.reshape(v.shape[0], n_groups, -1)
        m = jnp.mean(vg, axis=2, keepdims=True)
        var = jnp.mean((vg - m) ** 2, axis=2, keepdims=True)
        vn = ((vg - m) / jnp.sqrt(var + 1e-5)).reshape(v.shape)
        return vn * g.reshape(1, -1, 1, 1) + b.reshape(1, -1, 1, 1)

    def conv(v, w, b):
        o = lax.conv_general_dilated(v.astype(f32), w.astype(f32), (1, 1),
                                     ((1, 1), (1, 1)),
                                     dimension_numbers=("NCHW", "OIHW", "NCHW"),
                                     precision=prec)
        return o + b.reshape(1, -1, 1, 1)

    h = conv(silu(group_norm(x, params["norm1_g"], params["norm1_b"])),
             params["conv1_w"], params["conv1_b"])
    temb = silu(t) @ params["time_w"].T + params["time_b"]
    h = h + temb[:, :, None, None]
    h = conv(silu(group_norm(h, params["norm2_g"], params["norm2_b"])),
             params["conv2_w"], params["conv2_b"])
    if Cin != Cout:
        h = h + conv(x, params["sc_w"], params["sc_b"])
    else:
        h = h + x

    if has_attn:
        HW = H * W
        inp = h.reshape(N, Cout, HW).transpose(0, 2, 1)                     # (N, HW, C)
        qkv = jnp.einsum("blc,fc->blf", inp, params["qkv_w"], precision=prec) + params["qkv_b"]
        qkv = qkv.reshape(N, HW, n_heads, 3 * d_k)
        q, k, v = qkv[..., :d_k], qkv[..., d_k:2 * d_k], qkv[..., 2 * d_k:]
        scores = jnp.einsum("blid,bljd->blij", q, k, precision=prec)
        attn = scores / (d_k ** -0.5)
        attn = jax.nn.softmax(attn, axis=2)
        res = jnp.einsum("blij,bljd->blid", attn, v, precision=prec)
        res = res.reshape(N, HW, n_heads * d_k)
        res = jnp.einsum("blf,cf->blc", res, params["dense_w"], precision=prec) + params["dense_b"]
        res = res + inp
        h = res.transpose(0, 2, 1).reshape(N, Cout, H, W)
    return h


if __name__ == "__main__":
    # Small shapes consistent with the module: GroupNorm(16, C) needs C % 16 == 0.
    N, IN_CH, OUT_CH, TIME_CH, H, W = 2, 16, 32, 32, 16, 16
    N_GROUPS, N_HEADS = 16, 8
    D_K = OUT_CH                      # AttentionBlock default: d_k = n_ch
    HD = N_HEADS * D_K
    HAS_ATTN = True

    key = jax.random.PRNGKey(0)
    ks = list(jax.random.split(key, 20))

    def uniform(k, shape, fan_in):
        b = 1.0 / (fan_in ** 0.5)
        return jax.random.uniform(k, shape, jnp.float32, -b, b)

    x = jax.random.normal(ks[0], (N, IN_CH, H, W), jnp.float32)
    t = jax.random.normal(ks[1], (N, TIME_CH), jnp.float32)

    params = {
        "norm1_g": 1.0 + 0.1 * jax.random.normal(ks[2], (IN_CH,), jnp.float32),
        "norm1_b": 0.1 * jax.random.normal(ks[3], (IN_CH,), jnp.float32),
        "conv1_w": uniform(ks[4], (OUT_CH, IN_CH, 3, 3), IN_CH * 9),
        "conv1_b": uniform(ks[5], (OUT_CH,), IN_CH * 9),
        "time_w": uniform(ks[6], (OUT_CH, TIME_CH), TIME_CH),
        "time_b": uniform(ks[7], (OUT_CH,), TIME_CH),
        "norm2_g": 1.0 + 0.1 * jax.random.normal(ks[8], (OUT_CH,), jnp.float32),
        "norm2_b": 0.1 * jax.random.normal(ks[9], (OUT_CH,), jnp.float32),
        "conv2_w": uniform(ks[10], (OUT_CH, OUT_CH, 3, 3), OUT_CH * 9),
        "conv2_b": uniform(ks[11], (OUT_CH,), OUT_CH * 9),
        "sc_w": uniform(ks[12], (OUT_CH, IN_CH, 3, 3), IN_CH * 9),
        "sc_b": uniform(ks[13], (OUT_CH,), IN_CH * 9),
        "qkv_w": uniform(ks[14], (3 * HD, OUT_CH), OUT_CH),
        "qkv_b": uniform(ks[15], (3 * HD,), OUT_CH),
        "dense_w": uniform(ks[16], (OUT_CH, HD), HD),
        "dense_b": uniform(ks[17], (OUT_CH,), HD),
    }

    # Prime the roll-direction probe eagerly (cached for the jitted trace below).
    _roll_like_numpy()

    fwd = jax.jit(functools.partial(down_block_forward, n_groups=N_GROUPS,
                                    n_heads=N_HEADS, d_k=D_K, has_attn=HAS_ATTN))
    out = jax.block_until_ready(fwd(x, t, params))

    ref = jax.block_until_ready(
        reference_down_block(x, t, params, n_groups=N_GROUPS, n_heads=N_HEADS,
                             d_k=D_K, has_attn=HAS_ATTN))

    assert out.shape == (N, OUT_CH, H, W)
    rel = jnp.linalg.norm(out - ref) / jnp.linalg.norm(ref)
    max_abs = jnp.max(jnp.abs(out - ref))
    assert bool(rel < 5e-2), f"kernel/reference mismatch: rel L2 {rel}, max abs {max_abs}"
    print("KERNEL_OK")
</pallas_src>

<mosaic_0001>
module attributes {stable_mosaic.version = 11 : i64} {
  func.func @probe(%arg0: memref<8x128xf32, #tpu.memory_space<vmem>>, %arg1: memref<8x128xf32, #tpu.memory_space<vmem>>) attributes {dimension_semantics = [], scalar_prefetch = 0 : i64, scratch_operands = 0 : i64, tpu.core_type = #tpu.core_type<tc>} {
    %c0 = arith.constant 0 : index
    %c0_0 = arith.constant 0 : index
    %0 = vector.load %arg0[%c0, %c0_0] : memref<8x128xf32, #tpu.memory_space<vmem>>, vector<8x128xf32>
    %c1_i32 = arith.constant 1 : i32
    %1 = tpu.dynamic_rotate %0 by %c1_i32 dim 1 : vector<8x128xf32>, i32 -> vector<8x128xf32>
    %c0_1 = arith.constant 0 : index
    %c0_2 = arith.constant 0 : index
    %2 = vector.load %arg1[%c0_1, %c0_2] : memref<8x128xf32, #tpu.memory_space<vmem>>, vector<8x128xf32>
    tpu.vector_store %arg1[%c0_1, %c0_2], %1 {strides = array<i32>} : memref<8x128xf32, #tpu.memory_space<vmem>>, vector<8x128xf32>,
    return
  }
}

</mosaic_0001>

<llo_original>
// kernel: tpu_custom_call.1
$region0: #{tpu_custom_call.1}
  #allocation0 [shape = 'u32[]', space=smem, size = 0x4, offset = 0x4, fixed_abs, tag = 'smem constant byte address 0x4 - core index']
  #allocation1 [shape = 'u32[144,128]{1,0:T(1,128)}', space=vmem, size = 0x12000, scoped, tag = 'internal scratch']
  %s0 = inlined_call_operand.hbm [shape: f32[8,128], index: 0, kind: input, shape index: {}]
  %s1 = inlined_call_operand.hbm [shape: f32[8,128], index: 1, kind: output, shape index: {}]
  %s2 = sld [smem:[#allocation0]]
  $region18: #{tpu_custom_call.1} parent=0
    _
  %s4 = ssub.s32 1, %s2
  %s5 = scalar_select 0, %s4, %s2
  $region1: #{tpu_custom_call.1} parent=0
    #allocation2 [shape = 'u8[4096]{0}', space=vmem, size = 0x1000, scoped, tag = 'input window, operand 0, single buffered']
    #allocation3 [shape = 's32[1]{0}', space=sflag, size = 0x4, scoped, tag = 'scoped memory for tpu_custom_call.1']
    #allocation4 [shape = 's32[1]{0}', space=sflag, size = 0x4, scoped, tag = 'scoped memory for tpu_custom_call.1']
    #allocation5 [shape = 'u8[4096]{0}', space=vmem, size = 0x1000, scoped, tag = 'output window, operand 0, single buffered']
    %6 = vsyncpa [#allocation3], 0
    %7 = vsyncpa [#allocation4], 0
    // Predicated region
    $region2: #{tpu_custom_call.1} parent=1 // pred_check
      _
    $region3: #{tpu_custom_call.1} parent=1 // pred_check_branch
      %9 = sbr.rel (0) target = $region5
    $region4: #{tpu_custom_call.1} parent=1 // pred_region
      %s11 = ssub.s32 128, 128
      %12 = vsyncadd [#allocation3], %s11
      %s14 = sshll.u32 [#allocation2], 4
      %s15 = int_to_ptr.vmem [resolvable:$true] %s14
      %17 = dma.hbm_to_vmem [thread:$0]  %s0, 128, %s15, [#allocation3]
    $region5: #{tpu_custom_call.1} parent=1 // pred_fallthru
      _
    // Predicated region
    $region6: #{tpu_custom_call.1} parent=1 // pred_check
      _
    $region7: #{tpu_custom_call.1} parent=1 // pred_check_branch
      %19 = sbr.rel (0) target = $region9
    $region8: #{tpu_custom_call.1} parent=1 // pred_region
      %20 = dma.done [#allocation3], 128
    $region9: #{tpu_custom_call.1} parent=1 // pred_fallthru
      _
    %v21 = vld [vmem:[#allocation2] sm:$0xff]
    %22 = vrot.lane.b32.xlu0 %v21, 1
    %v23 = vpop.permute.xlu0 %22
    %24 = vst [vmem:[#allocation5] sm:$0xff] %v23
    // Predicated region
    $region10: #{tpu_custom_call.1} parent=1 // pred_check
      _
    $region11: #{tpu_custom_call.1} parent=1 // pred_check_branch
      %26 = sbr.rel (0) target = $region13
    $region12: #{tpu_custom_call.1} parent=1 // pred_region
      %s28 = ssub.s32 128, 128
      %29 = vsyncadd [#allocation4], %s28
      %s31 = sshll.u32 [#allocation5], 4
      %s32 = int_to_ptr.vmem [resolvable:$true] %s31
      %34 = dma.vmem_to_hbm [thread:$0]  %s32, 128, %s1, [#allocation4]
    $region13: #{tpu_custom_call.1} parent=1 // pred_fallthru
      _
    // Predicated region
    $region14: #{tpu_custom_call.1} parent=1 // pred_check
      _
    $region15: #{tpu_custom_call.1} parent=1 // pred_check_branch
      %36 = sbr.rel (0) target = $region17
    $region16: #{tpu_custom_call.1} parent=1 // pred_region
      %37 = dma.done [#allocation4], 128
    $region17: #{tpu_custom_call.1} parent=1 // pred_fallthru
      _
    %38 = vsyncpa [#allocation3], 1
    %39 = vsyncpa [#allocation4], 1

</llo_original>
